<compile_context>
chip_gen: v5e
topology: v5e:2x2
jax: 0.10.0
libtpu: 0.0.40
codegen_flags: <defaults>
</compile_context>

<pallas_src>
import jax
import jax.numpy as jnp
from jax.experimental import pallas as pl
from jax.experimental.pallas import tpu as pltpu

LN_EPS = 1e-5   # LayerNorm(dimension_bottleneck, layer_norm_eps=1e-5)


# --------------------------- fused Pallas kernel -----------------------------

def _classifier_kernel(x_ref, w1_ref, prow_ref, scal_ref, o_ref):
    """Linear -> LayerNorm -> PReLU -> Linear(->1) -> Sigmoid for one row tile.

    x_ref    : [R, d_in]   (bf16 or f32) row tile of the flattened input
    w1_ref   : [d_in, d_b] bottleneck weight (stored [in, out])
    prow_ref : [4, d_b]    rows = (b1, ln_gamma, ln_beta, w2)
    scal_ref : [2] SMEM    (prelu_alpha, fc_bias)
    o_ref    : [1, R]      lane-dense sigmoid outputs for this tile
    """
    # bottleneck matmul on the MXU, f32 accumulation
    y = jnp.dot(x_ref[...], w1_ref[...], preferred_element_type=jnp.float32)
    y = y + prow_ref[0:1, :]                                   # + b1

    # LayerNorm over the feature (lane) axis, f32 VPU math
    mu = jnp.mean(y, axis=-1, keepdims=True)
    var = jnp.mean(jnp.square(y - mu), axis=-1, keepdims=True)
    y = (y - mu) * jax.lax.rsqrt(var + LN_EPS)
    y = y * prow_ref[1:2, :] + prow_ref[2:3, :]                # gamma, beta

    # PReLU with a single shared alpha (scalar from SMEM)
    alpha = scal_ref[0]
    y = jnp.where(y >= 0.0, y, alpha * y)

    # fc to one logit per row, produced lane-dense as [1, R]:
    #   z[0, r] = sum_f w2[0, f] * y[r, f]   (trans-B matmul, M=1)
    w2 = prow_ref[3:4, :]                                      # [1, d_b]
    z = jax.lax.dot_general(w2, y, (((1,), (1,)), ((), ())),
                            preferred_element_type=jnp.float32)  # [1, R]
    z = z + scal_ref[1]                                        # + fc bias

    o_ref[...] = jax.nn.sigmoid(z)
    # TODO(synk): no dropout / training-only behavior in this module; nothing omitted.


# --------------------------- wrapper ------------------------------------------

def classifier_forward(x, params, tile_rows=1024):
    """x: [B, S, reduction_eeg[-1]] -> pred: [B, S, 1] (f32)."""
    b, s, d_in = x.shape
    d_b = params["w1"].shape[1]
    n = b * s

    # Row tile: multiple of 128 (lane-dense output blocks), capped at tile_rows.
    r = min(int(tile_rows), pl.cdiv(n, 128) * 128)
    r = max(128, (r // 128) * 128)
    n_pad = pl.cdiv(n, r) * r
    g = n_pad // r

    xf = x.reshape(n, d_in)
    if n_pad != n:
        xf = jnp.pad(xf, ((0, n_pad - n), (0, 0)))   # zero rows, sliced off below

    # Pack the four [d_b] parameter rows into one VMEM block; scalars go to SMEM.
    prow = jnp.stack(
        [params["b1"], params["ln_g"], params["ln_b"], params["w2"]], axis=0
    ).astype(jnp.float32)                                          # [4, d_b]
    scal = jnp.stack(
        [params["prelu"][0], params["b2"][0]]).astype(jnp.float32)  # [2]

    weight_bytes = (params["w1"].size * params["w1"].dtype.itemsize
                    + prow.size * 4 + scal.size * 4)
    cost = pl.CostEstimate(
        flops=2 * n_pad * d_in * d_b + 2 * n_pad * d_b,
        bytes_accessed=n_pad * d_in * xf.dtype.itemsize + n_pad * 4 + weight_bytes,
        transcendentals=n_pad,   # sigmoid
    )

    out = pl.pallas_call(
        _classifier_kernel,
        out_shape=jax.ShapeDtypeStruct((1, n_pad), jnp.float32),
        grid_spec=pltpu.PrefetchScalarGridSpec(
            num_scalar_prefetch=0,
            grid=(g,),
            in_specs=[
                pl.BlockSpec((r, d_in), lambda i: (i, 0)),          # x row tile
                pl.BlockSpec((d_in, d_b), lambda i: (0, 0)),        # w1 (resident)
                pl.BlockSpec((4, d_b), lambda i: (0, 0)),           # packed rows
                pl.BlockSpec(memory_space=pltpu.MemorySpace.SMEM),  # scalars
            ],
            out_specs=pl.BlockSpec((1, r), lambda i: (0, i)),       # lane-dense
        ),
        compiler_params=pltpu.CompilerParams(
            dimension_semantics=("parallel",)),
        cost_estimate=cost,
    )(xf, params["w1"], prow, scal)

    return out.reshape(n_pad)[:n].reshape(b, s, 1)


# --------------------------- reference (pure JAX) -----------------------------

def classifier_ref(x, params):
    y = jnp.dot(x, params["w1"], preferred_element_type=jnp.float32) + params["b1"]
    mu = jnp.mean(y, axis=-1, keepdims=True)
    var = jnp.mean(jnp.square(y - mu), axis=-1, keepdims=True)
    y = (y - mu) / jnp.sqrt(var + LN_EPS)
    y = y * params["ln_g"] + params["ln_b"]
    y = jnp.where(y >= 0.0, y, params["prelu"][0] * y)
    z = jnp.sum(y * params["w2"], axis=-1, keepdims=True) + params["b2"]
    return jax.nn.sigmoid(z)


# --------------------------- parameter init -----------------------------------

def init_params(key, d_in, d_bneck):
    ks = jax.random.split(key, 6)

    def nrm(k, shape, scale=0.1):
        return scale * jax.random.normal(k, shape, dtype=jnp.float32)

    return dict(
        w1=nrm(ks[0], (d_in, d_bneck)).astype(jnp.bfloat16),  # bottleneck weight [in,out]
        b1=nrm(ks[1], (d_bneck,)),                            # bottleneck bias
        ln_g=1.0 + nrm(ks[2], (d_bneck,)),                    # LayerNorm gamma
        ln_b=nrm(ks[3], (d_bneck,)),                          # LayerNorm beta
        prelu=jnp.array([0.25], dtype=jnp.float32),           # PReLU alpha
        w2=nrm(ks[4], (d_bneck,)),                            # fc weight (-> 1)
        b2=nrm(ks[5], (1,)),                                  # fc bias
    )


# --------------------------- main ----------------------------------------------

if __name__ == "__main__":
    # config: reduction_eeg=[32, 32], dimension_bottleneck=16
    # inputs: [batch=2, seq=8, reduction_eeg[-1]=32]
    B, S = 2, 8
    REDUCTION_EEG = [32, 32]
    D_BOTTLENECK = 16

    key = jax.random.PRNGKey(0)
    kx, kp = jax.random.split(key)
    # Producer emits bf16 (halves HBM read bytes of x); kernel accepts f32 too.
    x = jax.random.normal(kx, (B, S, REDUCTION_EEG[-1]), dtype=jnp.bfloat16)
    params = init_params(kp, REDUCTION_EEG[-1], D_BOTTLENECK)

    out = jax.block_until_ready(classifier_forward(x, params))

    assert out.shape == (B, S, 1), out.shape
    assert bool(jnp.all(jnp.isfinite(out)))
    assert bool(jnp.all((out >= 0.0) & (out <= 1.0)))

    ref = classifier_ref(x, params)
    assert bool(jnp.allclose(out, ref, atol=2e-2, rtol=2e-2))

    print("KERNEL_OK")
</pallas_src>

<mosaic_0001>
module attributes {stable_mosaic.version = 11 : i64} {
  func.func @_classifier_kernel(%arg0: i32, %arg1: memref<128x32xbf16, #tpu.memory_space<vmem>>, %arg2: memref<32x16xbf16, #tpu.memory_space<vmem>>, %arg3: memref<4x16xf32, #tpu.memory_space<vmem>>, %arg4: memref<2xf32, #tpu.memory_space<smem>>, %arg5: memref<1x128xf32, #tpu.memory_space<vmem>>) attributes {dimension_semantics = [#tpu.dimension_semantics<parallel>], iteration_bounds = array<i64: 1>, scalar_prefetch = 0 : i64, scratch_operands = 0 : i64, tpu.core_type = #tpu.core_type<tc>, window_params = [{transform_indices = @transform_0, window_bounds = array<i64: 128, 32>}, {pipeline_mode = #tpu.pipeline_mode<synchronous>, transform_indices = @transform_1, window_bounds = array<i64: 32, 16>}, {pipeline_mode = #tpu.pipeline_mode<synchronous>, transform_indices = @transform_2, window_bounds = array<i64: 4, 16>}, {transform_indices = @transform_3, window_bounds = array<i64: 2>}, {transform_indices = @transform_4, window_bounds = array<i64: 1, 128>}]} {
    %c0 = arith.constant 0 : index
    %c0_0 = arith.constant 0 : index
    %0 = vector.load %arg1[%c0, %c0_0] : memref<128x32xbf16, #tpu.memory_space<vmem>>, vector<128x32xbf16>
    %c0_1 = arith.constant 0 : index
    %c0_2 = arith.constant 0 : index
    %1 = vector.load %arg2[%c0_1, %c0_2] : memref<32x16xbf16, #tpu.memory_space<vmem>>, vector<32x16xbf16>
    %cst = arith.constant dense<0.000000e+00> : vector<128x16xf32>
    %2 = tpu.matmul %0, %1, %cst {dimension_numbers = #tpu.dot_dimension_numbers<[1], [0], [0], [1], [0, 0, 1, 1], [], []>} : vector<128x32xbf16>, vector<32x16xbf16>, vector<128x16xf32> -> vector<128x16xf32>
    %c0_3 = arith.constant 0 : index
    %c0_4 = arith.constant 0 : index
    %3 = vector.load %arg3[%c0_3, %c0_4] : memref<4x16xf32, #tpu.memory_space<vmem>>, vector<1x16xf32>
    %4 = vector.broadcast %3 : vector<1x16xf32> to vector<128x16xf32>
    %5 = arith.addf %2, %4 : vector<128x16xf32>
    %cst_5 = arith.constant dense<0.000000e+00> : vector<128xf32>
    %6 = vector.multi_reduction <add>, %5, %cst_5 [1] : vector<128x16xf32> to vector<128xf32>
    %7 = vector.shape_cast %6 : vector<128xf32> to vector<128x1xf32>
    %cst_6 = arith.constant 1.600000e+01 : f32
    %8 = vector.broadcast %cst_6 : f32 to vector<128x1xf32>
    %9 = arith.divf %7, %8 : vector<128x1xf32>
    %10 = vector.broadcast %9 : vector<128x1xf32> to vector<128x16xf32>
    %11 = arith.subf %5, %10 : vector<128x16xf32>
    %12 = arith.mulf %11, %11 : vector<128x16xf32>
    %cst_7 = arith.constant dense<0.000000e+00> : vector<128xf32>
    %13 = vector.multi_reduction <add>, %12, %cst_7 [1] : vector<128x16xf32> to vector<128xf32>
    %14 = vector.shape_cast %13 : vector<128xf32> to vector<128x1xf32>
    %cst_8 = arith.constant 1.600000e+01 : f32
    %15 = vector.broadcast %cst_8 : f32 to vector<128x1xf32>
    %16 = arith.divf %14, %15 : vector<128x1xf32>
    %17 = vector.broadcast %9 : vector<128x1xf32> to vector<128x16xf32>
    %18 = arith.subf %5, %17 : vector<128x16xf32>
    %cst_9 = arith.constant 9.99999974E-6 : f32
    %19 = vector.broadcast %cst_9 : f32 to vector<128x1xf32>
    %20 = arith.addf %16, %19 : vector<128x1xf32>
    %21 = math.rsqrt %20 : vector<128x1xf32>
    %22 = vector.broadcast %21 : vector<128x1xf32> to vector<128x16xf32>
    %23 = arith.mulf %18, %22 : vector<128x16xf32>
    %c1 = arith.constant 1 : index
    %c0_10 = arith.constant 0 : index
    %24 = vector.load %arg3[%c1, %c0_10] : memref<4x16xf32, #tpu.memory_space<vmem>>, vector<1x16xf32>
    %25 = vector.broadcast %24 : vector<1x16xf32> to vector<128x16xf32>
    %26 = arith.mulf %23, %25 : vector<128x16xf32>
    %c2 = arith.constant 2 : index
    %c0_11 = arith.constant 0 : index
    %27 = vector.load %arg3[%c2, %c0_11] : memref<4x16xf32, #tpu.memory_space<vmem>>, vector<1x16xf32>
    %28 = vector.broadcast %27 : vector<1x16xf32> to vector<128x16xf32>
    %29 = arith.addf %26, %28 : vector<128x16xf32>
    %c0_12 = arith.constant 0 : index
    %30 = memref.load %arg4[%c0_12] : memref<2xf32, #tpu.memory_space<smem>>
    %cst_13 = arith.constant 0.000000e+00 : f32
    %31 = vector.broadcast %cst_13 : f32 to vector<128x16xf32>
    %32 = arith.cmpf oge, %29, %31 : vector<128x16xf32>
    %33 = vector.broadcast %30 : f32 to vector<128x16xf32>
    %34 = arith.mulf %33, %29 : vector<128x16xf32>
    %35 = arith.select %32, %29, %34 : vector<128x16xi1>, vector<128x16xf32>
    %c3 = arith.constant 3 : index
    %c0_14 = arith.constant 0 : index
    %36 = vector.load %arg3[%c3, %c0_14] : memref<4x16xf32, #tpu.memory_space<vmem>>, vector<1x16xf32>
    %cst_15 = arith.constant dense<0.000000e+00> : vector<1x128xf32>
    %37 = tpu.matmul %36, %35, %cst_15 {dimension_numbers = #tpu.dot_dimension_numbers<[1], [1], [0], [0], [0, 0, 1, 0], [], []>} : vector<1x16xf32>, vector<128x16xf32>, vector<1x128xf32> -> vector<1x128xf32>
    %c1_16 = arith.constant 1 : index
    %38 = memref.load %arg4[%c1_16] : memref<2xf32, #tpu.memory_space<smem>>
    %39 = vector.broadcast %38 : f32 to vector<1x128xf32>
    %40 = arith.addf %37, %39 : vector<1x128xf32>
    %41 = arith.negf %40 : vector<1x128xf32>
    %42 = math.exp %41 : vector<1x128xf32>
    %cst_17 = arith.constant 1.000000e+00 : f32
    %43 = vector.broadcast %cst_17 : f32 to vector<1x128xf32>
    %44 = arith.addf %43, %42 : vector<1x128xf32>
    %45 = arith.divf %43, %44 : vector<1x128xf32>
    %c0_18 = arith.constant 0 : index
    %c0_19 = arith.constant 0 : index
    %46 = vector.load %arg5[%c0_18, %c0_19] : memref<1x128xf32, #tpu.memory_space<vmem>>, vector<1x128xf32>
    tpu.vector_store %arg5[%c0_18, %c0_19], %45 {strides = array<i32>} : memref<1x128xf32, #tpu.memory_space<vmem>>, vector<1x128xf32>,
    return
  }
  func.func @transform_0(%arg0: i32) -> (i32, i32) {
    %c0_i32 = arith.constant 0 : i32
    %c0_i32_0 = arith.constant 0 : i32
    return %arg0, %c0_i32 : i32, i32
  }
  func.func @transform_1(%arg0: i32) -> (i32, i32) {
    %c0_i32 = arith.constant 0 : i32
    %c0_i32_0 = arith.constant 0 : i32
    %c0_i32_1 = arith.constant 0 : i32
    return %c0_i32, %c0_i32_0 : i32, i32
  }
  func.func @transform_2(%arg0: i32) -> (i32, i32) {
    %c0_i32 = arith.constant 0 : i32
    %c0_i32_0 = arith.constant 0 : i32
    %c0_i32_1 = arith.constant 0 : i32
    return %c0_i32, %c0_i32_0 : i32, i32
  }
  func.func @transform_3(%arg0: i32) -> i32 {
    %c0_i32 = arith.constant 0 : i32
    %c0_i32_0 = arith.constant 0 : i32
    return %c0_i32 : i32
  }
  func.func @transform_4(%arg0: i32) -> (i32, i32) {
    %c0_i32 = arith.constant 0 : i32
    %c0_i32_0 = arith.constant 0 : i32
    return %c0_i32, %arg0 : i32, i32
  }
}

</mosaic_0001>

<llo_original>
// kernel: tpu_custom_call.1
$region0: #{tpu_custom_call.1}
  #allocation0 [shape = 'u32[]', space=smem, size = 0x4, offset = 0x4, fixed_abs, tag = 'smem constant byte address 0x4 - core index']
  #allocation1 [shape = 'u32[72,128]{1,0:T(1,128)}', space=vmem, size = 0x9000, scoped, tag = 'internal scratch']
  %s0 = inlined_call_operand.vmem [shape: bf16[128,32], index: 0, kind: input, shape index: {}]
  %s1 = inlined_call_operand.vmem [shape: bf16[32,16], index: 1, kind: input, shape index: {}]
  %s2 = inlined_call_operand.vmem [shape: f32[4,16], index: 2, kind: input, shape index: {}]
  %s3 = inlined_call_operand.vmem [shape: f32[2], index: 3, kind: input, shape index: {}]
  %s4 = inlined_call_operand.hbm [shape: f32[1,128], index: 4, kind: output, shape index: {}]
  %s5 = sld [smem:[#allocation0]]
  $region30: #{tpu_custom_call.1} parent=0
    _
  %s7 = ssub.s32 1, %s5
  %s8 = scalar_select 0, %s7, %s5
  $region1: #{tpu_custom_call.1} parent=0
    #allocation2 [shape = 'u8[512]{0}', space=smem, size = 0x200, scoped, tag = 'input window, operand 3, single buffered']
    #allocation3 [shape = 's32[1]{0}', space=sflag, size = 0x4, scoped, tag = 'scoped memory for tpu_custom_call.1']
    #allocation4 [shape = 's32[1]{0}', space=sflag, size = 0x4, scoped, tag = 'scoped memory for tpu_custom_call.1']
    #allocation5 [shape = 'u8[512]{0}', space=vmem, size = 0x400, scoped, tag = 'output window, operand 0, single buffered']
    %9 = vsyncpa [#allocation4], 0
    %10 = vsyncpa [#allocation3], 0
    // Predicated region
    $region2: #{tpu_custom_call.1} parent=1 // pred_check
      _
    $region3: #{tpu_custom_call.1} parent=1 // pred_check_branch
      %12 = sbr.rel (0) target = $region5
    $region4: #{tpu_custom_call.1} parent=1 // pred_region
      _
    $region5: #{tpu_custom_call.1} parent=1 // pred_fallthru
      _
    // Predicated region
    $region6: #{tpu_custom_call.1} parent=1 // pred_check
      _
    $region7: #{tpu_custom_call.1} parent=1 // pred_check_branch
      %14 = sbr.rel (0) target = $region9
    $region8: #{tpu_custom_call.1} parent=1 // pred_region
      _
    $region9: #{tpu_custom_call.1} parent=1 // pred_fallthru
      _
    // Predicated region
    $region10: #{tpu_custom_call.1} parent=1 // pred_check
      _
    $region11: #{tpu_custom_call.1} parent=1 // pred_check_branch
      %16 = sbr.rel (0) target = $region13
    $region12: #{tpu_custom_call.1} parent=1 // pred_region
      _
    $region13: #{tpu_custom_call.1} parent=1 // pred_fallthru
      _
    // Predicated region
    $region14: #{tpu_custom_call.1} parent=1 // pred_check
      _
    $region15: #{tpu_custom_call.1} parent=1 // pred_check_branch
      %18 = sbr.rel (0) target = $region17
    $region16: #{tpu_custom_call.1} parent=1 // pred_region
      %20 = vsyncadd [#allocation4], 0
      %s22 = sshll.u32 %s3, 4
      %s23 = int_to_ptr.vmem [resolvable:$true] %s22
      %25 = dma.vmem_to_smem %s23, 16, [#allocation2], [#allocation4]
    $region17: #{tpu_custom_call.1} parent=1 // pred_fallthru
      _
    // Predicated region
    $region18: #{tpu_custom_call.1} parent=1 // pred_check
      _
    $region19: #{tpu_custom_call.1} parent=1 // pred_check_branch
      %27 = sbr.rel (0) target = $region21
    $region20: #{tpu_custom_call.1} parent=1 // pred_region
      %29 = dma.done [#allocation4], 16
    $region21: #{tpu_custom_call.1} parent=1 // pred_fallthru
      _
    %30 = sfence
    %v32 = vld [vmem:[%s0] sm:$0xf]
    %v33 = vld [vmem:[%s0 + $0x4] sm:$0xf]
    %v34 = vld [vmem:[%s0 + $0x8] sm:$0xf]
    %v35 = vld [vmem:[%s0 + $0xc] sm:$0xf]
    %v36 = vld [vmem:[%s0 + $0x10] sm:$0xf]
    %v37 = vld [vmem:[%s0 + $0x14] sm:$0xf]
    %v38 = vld [vmem:[%s0 + $0x18] sm:$0xf]
    %v39 = vld [vmem:[%s0 + $0x1c] sm:$0xf]
    %v40 = vld [vmem:[%s0 + $0x20] sm:$0xf]
    %v41 = vld [vmem:[%s0 + $0x24] sm:$0xf]
    %v42 = vld [vmem:[%s0 + $0x28] sm:$0xf]
    %v43 = vld [vmem:[%s0 + $0x2c] sm:$0xf]
    %v44 = vld [vmem:[%s0 + $0x30] sm:$0xf]
    %v45 = vld [vmem:[%s0 + $0x34] sm:$0xf]
    %v46 = vld [vmem:[%s0 + $0x38] sm:$0xf]
    %v47 = vld [vmem:[%s0 + $0x3c] sm:$0xf]
    %v48 = vld [vmem:[%s1] sm:$0xf]
    %v49 = vld [vmem:[%s1 + $0x4] sm:$0xf]
    %v50 = vld [vmem:[%s1 + $0x8] sm:$0xf]
    %v51 = vld [vmem:[%s1 + $0xc] sm:$0xf]
    %v52 = vld [vmem:[%s2] sm:$0x1]
    %v53 = vperm.slane %v52, 0
    %v70 = vunpack.c.l.b16 %v32
    %v71 = vunpack.c.l.b16 %v33
    %v72 = vunpack.c.l.b16 %v34
    %v73 = vunpack.c.l.b16 %v35
    %v74 = vunpack.c.l.b16 %v36
    %v75 = vunpack.c.l.b16 %v37
    %v76 = vunpack.c.l.b16 %v38
    %v77 = vunpack.c.l.b16 %v39
    %v78 = vunpack.c.l.b16 %v40
    %v79 = vunpack.c.l.b16 %v41
    %v80 = vunpack.c.l.b16 %v42
    %v81 = vunpack.c.l.b16 %v43
    %v82 = vunpack.c.l.b16 %v44
    %v83 = vunpack.c.l.b16 %v45
    %v84 = vunpack.c.l.b16 %v46
    %v85 = vunpack.c.l.b16 %v47
    %v86 = vpack.c.b16 %v71, %v70
    %v87 = vpack.c.b16 %v73, %v72
    %v88 = vpack.c.b16 %v75, %v74
    %v89 = vpack.c.b16 %v77, %v76
    %v90 = vpack.c.b16 %v79, %v78
    %v91 = vpack.c.b16 %v81, %v80
    %v92 = vpack.c.b16 %v83, %v82
    %v93 = vpack.c.b16 %v85, %v84
    %v98 = vunpack.c.l.b16 %v48
    %v99 = vunpack.c.l.b16 %v49
    %v100 = vunpack.c.l.b16 %v50
    %v101 = vunpack.c.l.b16 %v51
    %v102 = vpack.c.b16 %v99, %v98
    %v103 = vpack.c.b16 %v101, %v100
    %vm106 = vcmask 261120
    %v108 = vsel %vm106, %v86, 0
    %v111 = vsel %vm106, %v87, 0
    %v114 = vsel %vm106, %v88, 0
    %v117 = vsel %vm106, %v89, 0
    %v120 = vsel %vm106, %v90, 0
    %v123 = vsel %vm106, %v91, 0
    %v126 = vsel %vm106, %v92, 0
    %v129 = vsel %vm106, %v93, 0
    %131 = vmatpush.bf16.msra.mxu0 0
    %132 = vmatpush.bf16.msra.mxu0 0
    %133 = vmatpush.bf16.msra.mxu0 0
    %134 = vmatpush.bf16.msra.mxu0 0
    %135 = vmatpush.bf16.msra.mxu0 0
    %136 = vmatpush.bf16.msra.mxu0 0
    %137 = vmatpush.bf16.msra.mxu0 %v103
    %138 = vmatpush.bf16.msra.mxu0 %v102
    %139 = vmatmul.bf16.gmra.mxu0 %v108
    %v140 = vpop.f32.mrf.mxu0
    %v141 = vadd.f32 %v53, %v140
    %v142 = vpop.f32.mrf.mxu0
    %v143 = vadd.f32 %v53, %v142
    %144 = vmatmul.bf16.gmra.mxu0 %v111
    %v145 = vpop.f32.mrf.mxu0
    %v146 = vadd.f32 %v53, %v145
    %v147 = vpop.f32.mrf.mxu0
    %v148 = vadd.f32 %v53, %v147
    %149 = vmatmul.bf16.gmra.mxu0 %v114
    %v150 = vpop.f32.mrf.mxu0
    %v151 = vadd.f32 %v53, %v150
    %v152 = vpop.f32.mrf.mxu0
    %v153 = vadd.f32 %v53, %v152
    %154 = vmatmul.bf16.gmra.mxu0 %v117
    %v155 = vpop.f32.mrf.mxu0
    %v156 = vadd.f32 %v53, %v155
    %v157 = vpop.f32.mrf.mxu0
    %v158 = vadd.f32 %v53, %v157
    %159 = vmatmul.bf16.gmra.mxu0 %v120
    %v160 = vpop.f32.mrf.mxu0
    %v161 = vadd.f32 %v53, %v160
    %v162 = vpop.f32.mrf.mxu0
    %v163 = vadd.f32 %v53, %v162
    %164 = vmatmul.bf16.gmra.mxu0 %v123
    %v165 = vpop.f32.mrf.mxu0
    %v166 = vadd.f32 %v53, %v165
    %v167 = vpop.f32.mrf.mxu0
    %v168 = vadd.f32 %v53, %v167
    %169 = vmatmul.bf16.gmra.mxu0 %v126
    %v170 = vpop.f32.mrf.mxu0
    %v171 = vadd.f32 %v53, %v170
    %v172 = vpop.f32.mrf.mxu0
    %v173 = vadd.f32 %v53, %v172
    %174 = vmatmul.bf16.gmra.mxu0 %v129
    %v175 = vpop.f32.mrf.mxu0
    %v176 = vadd.f32 %v53, %v175
    %v177 = vpop.f32.mrf.mxu0
    %v178 = vadd.f32 %v53, %v177
    %179 = vdwg.mxu0
    %vm180 = vcmask 130048
    %v181 = vsel %vm180, %v141, 0.0
    %182 = vadd.xlane.f32.xlu0 %v181
    %v183 = vpop.xlane.xlu0 %182
    %v184 = vsel %vm180, %v143, 0.0
    %185 = vadd.xlane.f32.xlu0 %v184
    %v186 = vpop.xlane.xlu0 %185
    %v187 = vsel %vm180, %v146, 0.0
    %188 = vadd.xlane.f32.xlu0 %v187
    %v189 = vpop.xlane.xlu0 %188
    %v190 = vsel %vm180, %v148, 0.0
    %191 = vadd.xlane.f32.xlu0 %v190
    %v192 = vpop.xlane.xlu0 %191
    %v193 = vsel %vm180, %v151, 0.0
    %194 = vadd.xlane.f32.xlu0 %v193
    %v195 = vpop.xlane.xlu0 %194
    %v196 = vsel %vm180, %v153, 0.0
    %197 = vadd.xlane.f32.xlu0 %v196
    %v198 = vpop.xlane.xlu0 %197
    %v199 = vsel %vm180, %v156, 0.0
    %200 = vadd.xlane.f32.xlu0 %v199
    %v201 = vpop.xlane.xlu0 %200
    %v202 = vsel %vm180, %v158, 0.0
    %203 = vadd.xlane.f32.xlu0 %v202
    %v204 = vpop.xlane.xlu0 %203
    %v205 = vsel %vm180, %v161, 0.0
    %206 = vadd.xlane.f32.xlu0 %v205
    %v207 = vpop.xlane.xlu0 %206
    %v208 = vsel %vm180, %v163, 0.0
    %209 = vadd.xlane.f32.xlu0 %v208
    %v210 = vpop.xlane.xlu0 %209
    %v211 = vsel %vm180, %v166, 0.0
    %212 = vadd.xlane.f32.xlu0 %v211
    %v213 = vpop.xlane.xlu0 %212
    %v214 = vsel %vm180, %v168, 0.0
    %215 = vadd.xlane.f32.xlu0 %v214
    %v216 = vpop.xlane.xlu0 %215
    %v217 = vsel %vm180, %v171, 0.0
    %218 = vadd.xlane.f32.xlu0 %v217
    %v219 = vpop.xlane.xlu0 %218
    %v220 = vsel %vm180, %v173, 0.0
    %221 = vadd.xlane.f32.xlu0 %v220
    %v222 = vpop.xlane.xlu0 %221
    %v223 = vsel %vm180, %v176, 0.0
    %224 = vadd.xlane.f32.xlu0 %v223
    %v225 = vpop.xlane.xlu0 %224
    %v226 = vsel %vm180, %v178, 0.0
    %227 = vadd.xlane.f32.xlu0 %v226
    %v228 = vpop.xlane.xlu0 %227
    %v229 = vrcp.pop 16.0
    %v230 = vmul.f32 16.0, %v229
    %v231 = vsub.f32 1.0, %v230
    %v232 = vmul.f32 %v229, %v231
    %v233 = vadd.f32 %v229, %v232
    %vm234 = vweird.f32 %v229
    %v235 = vsel %vm234, %v229, %v233
    %v236 = vmul.f32 %v183, %v235
    %v237 = vmul.f32 %v186, %v235
    %v238 = vmul.f32 %v189, %v235
    %v239 = vmul.f32 %v192, %v235
    %v240 = vmul.f32 %v195, %v235
    %v241 = vmul.f32 %v198, %v235
    %v242 = vmul.f32 %v201, %v235
    %v243 = vmul.f32 %v204, %v235
    %v244 = vmul.f32 %v207, %v235
    %v245 = vmul.f32 %v210, %v235
    %v246 = vmul.f32 %v213, %v235
    %v247 = vmul.f32 %v216, %v235
    %v248 = vmul.f32 %v219, %v235
    %v249 = vmul.f32 %v222, %v235
    %v250 = vmul.f32 %v225, %v235
    %v251 = vmul.f32 %v228, %v235
    %v252 = vsub.f32 %v141, %v236
    %v253 = vsub.f32 %v143, %v237
    %v254 = vsub.f32 %v146, %v238
    %v255 = vsub.f32 %v148, %v239
    %v256 = vsub.f32 %v151, %v240
    %v257 = vsub.f32 %v153, %v241
    %v258 = vsub.f32 %v156, %v242
    %v259 = vsub.f32 %v158, %v243
    %v260 = vsub.f32 %v161, %v244
    %v261 = vsub.f32 %v163, %v245
    %v262 = vsub.f32 %v166, %v246
    %v263 = vsub.f32 %v168, %v247
    %v264 = vsub.f32 %v171, %v248
    %v265 = vsub.f32 %v173, %v249
    %v266 = vsub.f32 %v176, %v250
    %v267 = vsub.f32 %v178, %v251
    %v268 = vmul.f32 %v252, %v252
    %v269 = vmul.f32 %v253, %v253
    %v270 = vmul.f32 %v254, %v254
    %v271 = vmul.f32 %v255, %v255
    %v272 = vmul.f32 %v256, %v256
    %v273 = vmul.f32 %v257, %v257
    %v274 = vmul.f32 %v258, %v258
    %v275 = vmul.f32 %v259, %v259
    %v276 = vmul.f32 %v260, %v260
    %v277 = vmul.f32 %v261, %v261
    %v278 = vmul.f32 %v262, %v262
    %v279 = vmul.f32 %v263, %v263
    %v280 = vmul.f32 %v264, %v264
    %v281 = vmul.f32 %v265, %v265
    %v282 = vmul.f32 %v266, %v266
    %v283 = vmul.f32 %v267, %v267
    %v284 = vsel %vm180, %v268, 0.0
    %285 = vadd.xlane.f32.xlu0 %v284
    %v286 = vpop.xlane.xlu0 %285
    %v287 = vsel %vm180, %v269, 0.0
    %288 = vadd.xlane.f32.xlu0 %v287
    %v289 = vpop.xlane.xlu0 %288
    %v290 = vsel %vm180, %v270, 0.0
    %291 = vadd.xlane.f32.xlu0 %v290
    %v292 = vpop.xlane.xlu0 %291
    %v293 = vsel %vm180, %v271, 0.0
    %294 = vadd.xlane.f32.xlu0 %v293
    %v295 = vpop.xlane.xlu0 %294
    %v296 = vsel %vm180, %v272, 0.0
    %297 = vadd.xlane.f32.xlu0 %v296
    %v298 = vpop.xlane.xlu0 %297
    %v299 = vsel %vm180, %v273, 0.0
    %300 = vadd.xlane.f32.xlu0 %v299
    %v301 = vpop.xlane.xlu0 %300
    %v302 = vsel %vm180, %v274, 0.0
    %303 = vadd.xlane.f32.xlu0 %v302
    %v304 = vpop.xlane.xlu0 %303
    %v305 = vsel %vm180, %v275, 0.0
    %306 = vadd.xlane.f32.xlu0 %v305
    %v307 = vpop.xlane.xlu0 %306
    %v308 = vsel %vm180, %v276, 0.0
    %309 = vadd.xlane.f32.xlu0 %v308
    %v310 = vpop.xlane.xlu0 %309
    %v311 = vsel %vm180, %v277, 0.0
    %312 = vadd.xlane.f32.xlu0 %v311
    %v313 = vpop.xlane.xlu0 %312
    %v314 = vsel %vm180, %v278, 0.0
    %315 = vadd.xlane.f32.xlu0 %v314
    %v316 = vpop.xlane.xlu0 %315
    %v317 = vsel %vm180, %v279, 0.0
    %318 = vadd.xlane.f32.xlu0 %v317
    %v319 = vpop.xlane.xlu0 %318
    %v320 = vsel %vm180, %v280, 0.0
    %321 = vadd.xlane.f32.xlu0 %v320
    %v322 = vpop.xlane.xlu0 %321
    %v323 = vsel %vm180, %v281, 0.0
    %324 = vadd.xlane.f32.xlu0 %v323
    %v325 = vpop.xlane.xlu0 %324
    %v326 = vsel %vm180, %v282, 0.0
    %327 = vadd.xlane.f32.xlu0 %v326
    %v328 = vpop.xlane.xlu0 %327
    %v329 = vsel %vm180, %v283, 0.0
    %330 = vadd.xlane.f32.xlu0 %v329
    %v331 = vpop.xlane.xlu0 %330
    %v332 = vmul.f32 %v286, %v235
    %v333 = vmul.f32 %v289, %v235
    %v334 = vmul.f32 %v292, %v235
    %v335 = vmul.f32 %v295, %v235
    %v336 = vmul.f32 %v298, %v235
    %v337 = vmul.f32 %v301, %v235
    %v338 = vmul.f32 %v304, %v235
    %v339 = vmul.f32 %v307, %v235
    %v340 = vmul.f32 %v310, %v235
    %v341 = vmul.f32 %v313, %v235
    %v342 = vmul.f32 %v316, %v235
    %v343 = vmul.f32 %v319, %v235
    %v344 = vmul.f32 %v322, %v235
    %v345 = vmul.f32 %v325, %v235
    %v346 = vmul.f32 %v328, %v235
    %v347 = vmul.f32 %v331, %v235
    %v348 = vadd.f32 %v332, 1e-05
    %v349 = vadd.f32 %v333, 1e-05
    %v350 = vadd.f32 %v334, 1e-05
    %v351 = vadd.f32 %v335, 1e-05
    %v352 = vadd.f32 %v336, 1e-05
    %v353 = vadd.f32 %v337, 1e-05
    %v354 = vadd.f32 %v338, 1e-05
    %v355 = vadd.f32 %v339, 1e-05
    %v356 = vadd.f32 %v340, 1e-05
    %v357 = vadd.f32 %v341, 1e-05
    %v358 = vadd.f32 %v342, 1e-05
    %v359 = vadd.f32 %v343, 1e-05
    %v360 = vadd.f32 %v344, 1e-05
    %v361 = vadd.f32 %v345, 1e-05
    %v362 = vadd.f32 %v346, 1e-05
    %v363 = vadd.f32 %v347, 1e-05
    %v364 = vrsqrt.pop %v348
    %v365 = vmul.f32 %v364, %v348
    %v366 = vmul.f32 %v365, %v364
    %v367 = vmul.f32 0.5, %v366
    %v368 = vsub.f32 1.5, %v367
    %v369 = vmul.f32 %v364, %v368
    %vm370 = vweird.f32 %v348
    %vm371 = vweird.f32 %v364
    %vm372 = vmor %vm370, %vm371
    %v373 = vsel %vm372, %v364, %v369
    %v374 = vrsqrt.pop %v349
    %v375 = vmul.f32 %v374, %v349
    %v376 = vmul.f32 %v375, %v374
    %v377 = vmul.f32 0.5, %v376
    %v378 = vsub.f32 1.5, %v377
    %v379 = vmul.f32 %v374, %v378
    %vm380 = vweird.f32 %v349
    %vm381 = vweird.f32 %v374
    %vm382 = vmor %vm380, %vm381
    %v383 = vsel %vm382, %v374, %v379
    %v384 = vrsqrt.pop %v350
    %v385 = vmul.f32 %v384, %v350
    %v386 = vmul.f32 %v385, %v384
    %v387 = vmul.f32 0.5, %v386
    %v388 = vsub.f32 1.5, %v387
    %v389 = vmul.f32 %v384, %v388
    %vm390 = vweird.f32 %v350
    %vm391 = vweird.f32 %v384
    %vm392 = vmor %vm390, %vm391
    %v393 = vsel %vm392, %v384, %v389
    %v394 = vrsqrt.pop %v351
    %v395 = vmul.f32 %v394, %v351
    %v396 = vmul.f32 %v395, %v394
    %v397 = vmul.f32 0.5, %v396
    %v398 = vsub.f32 1.5, %v397
    %v399 = vmul.f32 %v394, %v398
    %vm400 = vweird.f32 %v351
    %vm401 = vweird.f32 %v394
    %vm402 = vmor %vm400, %vm401
    %v403 = vsel %vm402, %v394, %v399
    %v404 = vrsqrt.pop %v352
    %v405 = vmul.f32 %v404, %v352
    %v406 = vmul.f32 %v405, %v404
    %v407 = vmul.f32 0.5, %v406
    %v408 = vsub.f32 1.5, %v407
    %v409 = vmul.f32 %v404, %v408
    %vm410 = vweird.f32 %v352
    %vm411 = vweird.f32 %v404
    %vm412 = vmor %vm410, %vm411
    %v413 = vsel %vm412, %v404, %v409
    %v414 = vrsqrt.pop %v353
    %v415 = vmul.f32 %v414, %v353
    %v416 = vmul.f32 %v415, %v414
    %v417 = vmul.f32 0.5, %v416
    %v418 = vsub.f32 1.5, %v417
    %v419 = vmul.f32 %v414, %v418
    %vm420 = vweird.f32 %v353
    %vm421 = vweird.f32 %v414
    %vm422 = vmor %vm420, %vm421
    %v423 = vsel %vm422, %v414, %v419
    %v424 = vrsqrt.pop %v354
    %v425 = vmul.f32 %v424, %v354
    %v426 = vmul.f32 %v425, %v424
    %v427 = vmul.f32 0.5, %v426
    %v428 = vsub.f32 1.5, %v427
    %v429 = vmul.f32 %v424, %v428
    %vm430 = vweird.f32 %v354
    %vm431 = vweird.f32 %v424
    %vm432 = vmor %vm430, %vm431
    %v433 = vsel %vm432, %v424, %v429
    %v434 = vrsqrt.pop %v355
    %v435 = vmul.f32 %v434, %v355
    %v436 = vmul.f32 %v435, %v434
    %v437 = vmul.f32 0.5, %v436
    %v438 = vsub.f32 1.5, %v437
    %v439 = vmul.f32 %v434, %v438
    %vm440 = vweird.f32 %v355
    %vm441 = vweird.f32 %v434
    %vm442 = vmor %vm440, %vm441
    %v443 = vsel %vm442, %v434, %v439
    %v444 = vrsqrt.pop %v356
    %v445 = vmul.f32 %v444, %v356
    %v446 = vmul.f32 %v445, %v444
    %v447 = vmul.f32 0.5, %v446
    %v448 = vsub.f32 1.5, %v447
    %v449 = vmul.f32 %v444, %v448
    %vm450 = vweird.f32 %v356
    %vm451 = vweird.f32 %v444
    %vm452 = vmor %vm450, %vm451
    %v453 = vsel %vm452, %v444, %v449
    %v454 = vrsqrt.pop %v357
    %v455 = vmul.f32 %v454, %v357
    %v456 = vmul.f32 %v455, %v454
    %v457 = vmul.f32 0.5, %v456
    %v458 = vsub.f32 1.5, %v457
    %v459 = vmul.f32 %v454, %v458
    %vm460 = vweird.f32 %v357
    %vm461 = vweird.f32 %v454
    %vm462 = vmor %vm460, %vm461
    %v463 = vsel %vm462, %v454, %v459
    %v464 = vrsqrt.pop %v358
    %v465 = vmul.f32 %v464, %v358
    %v466 = vmul.f32 %v465, %v464
    %v467 = vmul.f32 0.5, %v466
    %v468 = vsub.f32 1.5, %v467
    %v469 = vmul.f32 %v464, %v468
    %vm470 = vweird.f32 %v358
    %vm471 = vweird.f32 %v464
    %vm472 = vmor %vm470, %vm471
    %v473 = vsel %vm472, %v464, %v469
    %v474 = vrsqrt.pop %v359
    %v475 = vmul.f32 %v474, %v359
    %v476 = vmul.f32 %v475, %v474
    %v477 = vmul.f32 0.5, %v476
    %v478 = vsub.f32 1.5, %v477
    %v479 = vmul.f32 %v474, %v478
    %vm480 = vweird.f32 %v359
    %vm481 = vweird.f32 %v474
    %vm482 = vmor %vm480, %vm481
    %v483 = vsel %vm482, %v474, %v479
    %v484 = vrsqrt.pop %v360
    %v485 = vmul.f32 %v484, %v360
    %v486 = vmul.f32 %v485, %v484
    %v487 = vmul.f32 0.5, %v486
    %v488 = vsub.f32 1.5, %v487
    %v489 = vmul.f32 %v484, %v488
    %vm490 = vweird.f32 %v360
    %vm491 = vweird.f32 %v484
    %vm492 = vmor %vm490, %vm491
    %v493 = vsel %vm492, %v484, %v489
    %v494 = vrsqrt.pop %v361
    %v495 = vmul.f32 %v494, %v361
    %v496 = vmul.f32 %v495, %v494
    %v497 = vmul.f32 0.5, %v496
    %v498 = vsub.f32 1.5, %v497
    %v499 = vmul.f32 %v494, %v498
    %vm500 = vweird.f32 %v361
    %vm501 = vweird.f32 %v494
    %vm502 = vmor %vm500, %vm501
    %v503 = vsel %vm502, %v494, %v499
    %v504 = vrsqrt.pop %v362
    %v505 = vmul.f32 %v504, %v362
    %v506 = vmul.f32 %v505, %v504
    %v507 = vmul.f32 0.5, %v506
    %v508 = vsub.f32 1.5, %v507
    %v509 = vmul.f32 %v504, %v508
    %vm510 = vweird.f32 %v362
    %vm511 = vweird.f32 %v504
    %vm512 = vmor %vm510, %vm511
    %v513 = vsel %vm512, %v504, %v509
    %v514 = vrsqrt.pop %v363
    %v515 = vmul.f32 %v514, %v363
    %v516 = vmul.f32 %v515, %v514
    %v517 = vmul.f32 0.5, %v516
    %v518 = vsub.f32 1.5, %v517
    %v519 = vmul.f32 %v514, %v518
    %vm520 = vweird.f32 %v363
    %vm521 = vweird.f32 %v514
    %vm522 = vmor %vm520, %vm521
    %v523 = vsel %vm522, %v514, %v519
    %v524 = vmul.f32 %v252, %v373
    %v525 = vmul.f32 %v253, %v383
    %v526 = vmul.f32 %v254, %v393
    %v527 = vmul.f32 %v255, %v403
    %v528 = vmul.f32 %v256, %v413
    %v529 = vmul.f32 %v257, %v423
    %v530 = vmul.f32 %v258, %v433
    %v531 = vmul.f32 %v259, %v443
    %v532 = vmul.f32 %v260, %v453
    %v533 = vmul.f32 %v261, %v463
    %v534 = vmul.f32 %v262, %v473
    %v535 = vmul.f32 %v263, %v483
    %v536 = vmul.f32 %v264, %v493
    %v537 = vmul.f32 %v265, %v503
    %v538 = vmul.f32 %v266, %v513
    %v539 = vmul.f32 %v267, %v523
    %v540 = vld [vmem:[%s2 + $0x1] sm:$0x1]
    %v541 = vperm.slane %v540, 0
    %v542 = vmul.f32 %v524, %v541
    %v543 = vmul.f32 %v525, %v541
    %v544 = vmul.f32 %v526, %v541
    %v545 = vmul.f32 %v527, %v541
    %v546 = vmul.f32 %v528, %v541
    %v547 = vmul.f32 %v529, %v541
    %v548 = vmul.f32 %v530, %v541
    %v549 = vmul.f32 %v531, %v541
    %v550 = vmul.f32 %v532, %v541
    %v551 = vmul.f32 %v533, %v541
    %v552 = vmul.f32 %v534, %v541
    %v553 = vmul.f32 %v535, %v541
    %v554 = vmul.f32 %v536, %v541
    %v555 = vmul.f32 %v537, %v541
    %v556 = vmul.f32 %v538, %v541
    %v557 = vmul.f32 %v539, %v541
    %v558 = vld [vmem:[%s2 + $0x2] sm:$0x1]
    %v559 = vperm.slane %v558, 0
    %v560 = vadd.f32 %v542, %v559
    %v561 = vadd.f32 %v543, %v559
    %v562 = vadd.f32 %v544, %v559
    %v563 = vadd.f32 %v545, %v559
    %v564 = vadd.f32 %v546, %v559
    %v565 = vadd.f32 %v547, %v559
    %v566 = vadd.f32 %v548, %v559
    %v567 = vadd.f32 %v549, %v559
    %v568 = vadd.f32 %v550, %v559
    %v569 = vadd.f32 %v551, %v559
    %v570 = vadd.f32 %v552, %v559
    %v571 = vadd.f32 %v553, %v559
    %v572 = vadd.f32 %v554, %v559
    %v573 = vadd.f32 %v555, %v559
    %v574 = vadd.f32 %v556, %v559
    %v575 = vadd.f32 %v557, %v559
    %s576 = sld [smem:[#allocation2]]
    %vm577 = vcmp.ge.f32.partialorder %v560, 0.0
    %vm578 = vcmp.ge.f32.partialorder %v561, 0.0
    %vm579 = vcmp.ge.f32.partialorder %v562, 0.0
    %vm580 = vcmp.ge.f32.partialorder %v563, 0.0
    %vm581 = vcmp.ge.f32.partialorder %v564, 0.0
    %vm582 = vcmp.ge.f32.partialorder %v565, 0.0
    %vm583 = vcmp.ge.f32.partialorder %v566, 0.0
    %vm584 = vcmp.ge.f32.partialorder %v567, 0.0
    %vm585 = vcmp.ge.f32.partialorder %v568, 0.0
    %vm586 = vcmp.ge.f32.partialorder %v569, 0.0
    %vm587 = vcmp.ge.f32.partialorder %v570, 0.0
    %vm588 = vcmp.ge.f32.partialorder %v571, 0.0
    %vm589 = vcmp.ge.f32.partialorder %v572, 0.0
    %vm590 = vcmp.ge.f32.partialorder %v573, 0.0
    %vm591 = vcmp.ge.f32.partialorder %v574, 0.0
    %vm592 = vcmp.ge.f32.partialorder %v575, 0.0
    %v593 = vstv %s576
    %v594 = vmul.f32 %v593, %v560
    %v595 = vmul.f32 %v593, %v561
    %v596 = vmul.f32 %v593, %v562
    %v597 = vmul.f32 %v593, %v563
    %v598 = vmul.f32 %v593, %v564
    %v599 = vmul.f32 %v593, %v565
    %v600 = vmul.f32 %v593, %v566
    %v601 = vmul.f32 %v593, %v567
    %v602 = vmul.f32 %v593, %v568
    %v603 = vmul.f32 %v593, %v569
    %v604 = vmul.f32 %v593, %v570
    %v605 = vmul.f32 %v593, %v571
    %v606 = vmul.f32 %v593, %v572
    %v607 = vmul.f32 %v593, %v573
    %v608 = vmul.f32 %v593, %v574
    %v609 = vmul.f32 %v593, %v575
    %v610 = vsel %vm577, %v560, %v594
    %v611 = vsel %vm578, %v561, %v595
    %v612 = vsel %vm579, %v562, %v596
    %v613 = vsel %vm580, %v563, %v597
    %v614 = vsel %vm581, %v564, %v598
    %v615 = vsel %vm582, %v565, %v599
    %v616 = vsel %vm583, %v566, %v600
    %v617 = vsel %vm584, %v567, %v601
    %v618 = vsel %vm585, %v568, %v602
    %v619 = vsel %vm586, %v569, %v603
    %v620 = vsel %vm587, %v570, %v604
    %v621 = vsel %vm588, %v571, %v605
    %v622 = vsel %vm589, %v572, %v606
    %v623 = vsel %vm590, %v573, %v607
    %v624 = vsel %vm591, %v574, %v608
    %v625 = vsel %vm592, %v575, %v609
    %v626 = vld [vmem:[%s2 + $0x3] sm:$0x1]
    %s627 = sld [smem:[#allocation2 + $0x1]]
    %v628 = vstv %s627
    %v630 = vsel %vm180, %v626, 0
    %v633 = vsel %vm180, %v610, 0
    %v636 = vsel %vm180, %v611, 0
    %v639 = vsel %vm180, %v612, 0
    %v642 = vsel %vm180, %v613, 0
    %v645 = vsel %vm180, %v614, 0
    %v648 = vsel %vm180, %v615, 0
    %v651 = vsel %vm180, %v616, 0
    %v654 = vsel %vm180, %v617, 0
    %v657 = vsel %vm180, %v618, 0
    %v660 = vsel %vm180, %v619, 0
    %v663 = vsel %vm180, %v620, 0
    %v666 = vsel %vm180, %v621, 0
    %v669 = vsel %vm180, %v622, 0
    %v672 = vsel %vm180, %v623, 0
    %v675 = vsel %vm180, %v624, 0
    %v678 = vsel %vm180, %v625, 0
    %680 = vmatpush.xpose.msra.mxu0 %v678
    %681 = vmatpush.xpose.msra.mxu0 %v675
    %682 = vmatpush.xpose.msra.mxu0 %v672
    %683 = vmatpush.xpose.msra.mxu0 %v669
    %684 = vmatpush.xpose.msra.mxu0 %v666
    %685 = vmatpush.xpose.msra.mxu0 %v663
    %686 = vmatpush.xpose.msra.mxu0 %v660
    %687 = vmatpush.xpose.msra.mxu0 %v657
    %688 = vmatpush.xpose.msra.mxu0 %v654
    %689 = vmatpush.xpose.msra.mxu0 %v651
    %690 = vmatpush.xpose.msra.mxu0 %v648
    %691 = vmatpush.xpose.msra.mxu0 %v645
    %692 = vmatpush.xpose.msra.mxu0 %v642
    %693 = vmatpush.xpose.msra.mxu0 %v639
    %694 = vmatpush.xpose.msra.mxu0 %v636
    %695 = vmatpush.xpose.msra.mxu0 %v633
    %696 = vmatmul.f32.gmra.mxu0 %v630
    %v697 = vpop.f32.mrf.mxu0
    %v698 = vadd.f32 %v628, %v697
    %699 = vdwg.mxu0
    %v700 = vxor.u32 %v698, 2147483648
    %v701 = vmul.f32 %v700, 1.442695
    %v702 = vpow.pop %v701
    %v703 = vadd.f32 %v702, 1.0
    %v704 = vrcp.pop %v703
    %v705 = vmul.f32 %v703, %v704
    %v706 = vsub.f32 1.0, %v705
    %v707 = vmul.f32 %v704, %v706
    %v708 = vadd.f32 %v704, %v707
    %vm709 = vweird.f32 %v703
    %vm710 = vweird.f32 %v704
    %vm711 = vmor %vm709, %vm710
    %v712 = vsel %vm711, %v704, %v708
    %v713 = vand.u32 2147483647, %v703
    %vm714 = vcmp.eq.f32.partialorder %v713, 8.507059e+37
    %v715 = vand.u32 %v703, 2147483648
    %v716 = vor.u32 1.1754944e-38, %v715
    %v717 = vsel %vm714, %v716, %v712
    %v718 = vmul.f32 1.0, %v717
    %719 = vst [vmem:[#allocation5] sm:$0x1] %v718
    // Predicated region
    $region22: #{tpu_custom_call.1} parent=1 // pred_check
      _
    $region23: #{tpu_custom_call.1} parent=1 // pred_check_branch
      %721 = sbr.rel (0) target = $region25
    $region24: #{tpu_custom_call.1} parent=1 // pred_region
      %723 = vsyncadd [#allocation3], 0
      %s725 = sshll.u32 [#allocation5], 4
      %s726 = int_to_ptr.vmem [resolvable:$true] %s725
      %s727 = sshll.u32 %s4, 4
      %s728 = int_to_ptr.hbm [resolvable:$true] %s727
      %730 = dma.vmem_to_hbm [thread:$0]  %s726, 16, %s728, [#allocation3]
    $region25: #{tpu_custom_call.1} parent=1 // pred_fallthru
      _
    // Predicated region
    $region26: #{tpu_custom_call.1} parent=1 // pred_check
      _
    $region27: #{tpu_custom_call.1} parent=1 // pred_check_branch
      %732 = sbr.rel (0) target = $region29
    $region28: #{tpu_custom_call.1} parent=1 // pred_region
      %734 = dma.done [#allocation3], 16
    $region29: #{tpu_custom_call.1} parent=1 // pred_fallthru
      _
    %735 = vsyncpa [#allocation3], 1
    %736 = vsyncpa [#allocation4], 1

</llo_original>
